<compile_context>
chip_gen: v7x
topology: tpu7x:2x2x1
jax: 0.10.0
libtpu: 0.0.40
codegen_flags: <defaults>
</compile_context>

<pallas_src>
import functools

import jax
import jax.numpy as jnp
from jax.experimental import pallas as pl
from jax.experimental.pallas import tpu as pltpu


def _fused_double_q_kernel(x_ref, w1_ref, w2_ref, w3t_ref, b12_ref, b3_ref,
                           out_ref, *, two_h1, two_h2, matmul_dtype):
    """One batch tile of the fused twin-Q MLP.

    Matmuls run on the MXU with f32 accumulation; bias-add / ReLU stay f32 on the
    VPU.  Output is produced lane-dense as (2, tb): row 0 = q1, row 1 = q2.
    """
    # TODO(synk): activation is hard-coded to ReLU (the SVG-0 default); the torch
    # module accepts an arbitrary `activation` constructor argument.
    x = x_ref[...].astype(matmul_dtype)            # (tb, D), D = obs_dim + act_dim
    b1 = b12_ref[0:1, :two_h1]                     # (1, 2*H1) f32
    b2 = b12_ref[1:2, :two_h2]                     # (1, 2*H2) f32

    # Layer 1: single merged dot (both heads live side-by-side in w1).
    h = jnp.dot(x, w1_ref[...], preferred_element_type=jnp.float32) + b1
    h = jnp.maximum(h, 0.0)                        # ReLU (hidden layer 1)

    # Layer 2: block-diagonal (2*H1, 2*H2) keeps the two heads independent.
    h = jnp.dot(h.astype(matmul_dtype), w2_ref[...],
                preferred_element_type=jnp.float32) + b2
    h = jnp.maximum(h, 0.0)                        # ReLU (hidden layer 2)

    # Layer 3, lane-dense: (2, 2*H2) contracted with (tb, 2*H2) on the hidden dim
    # -> (2, tb).  This is the standard A @ B^T MXU pattern; no output transpose.
    q = jax.lax.dot_general(
        w3t_ref[...], h.astype(matmul_dtype),
        dimension_numbers=(((1,), (1,)), ((), ())),
        preferred_element_type=jnp.float32)
    out_ref[...] = q + b3_ref[...]                 # b3 (2, 1) broadcasts over lanes


def double_q_forward(obs, act, fused_params, *, block_b=4096, core_parallel=False):
    """fused_params = (w1, w2, w3t, b12, b3) from pack_params.

    Returns (q1, q2), each of shape [B] float32, matching the torch module.
    Set core_parallel=True on v7x (2 TensorCores per chip) for large batches.
    """
    w1, w2, w3t, b12, b3 = fused_params
    matmul_dtype = w1.dtype                        # weights pre-cast in pack_params

    obs = obs.astype(jnp.float32)
    act = act.astype(jnp.float32)
    x = jnp.concatenate([obs, act], axis=-1)       # same producer-side cat as torch

    B, D = x.shape
    two_h1, two_h2 = w2.shape

    # Batch tile: full batch if small, otherwise large (multiple-of-8/128) tiles to
    # amortize per-grid-step overhead.  Last partial tile is masked by Pallas.
    tb = B if B <= block_b else block_b
    grid = (pl.cdiv(B, tb),)

    kernel = functools.partial(_fused_double_q_kernel, two_h1=two_h1,
                               two_h2=two_h2, matmul_dtype=matmul_dtype)

    # Weights / biases: full block, constant index_map -> VMEM-resident across grid
    # steps; single-buffered (no point double-buffering a constant block).
    def const(a):
        return pl.BlockSpec(a.shape, lambda i: (0, 0),
                            pipeline_mode=pl.Buffered(1))

    batch_sem = pltpu.CORE_PARALLEL if core_parallel else "parallel"

    out = pl.pallas_call(
        kernel,
        out_shape=jax.ShapeDtypeStruct((2, B), jnp.float32),
        grid=grid,
        in_specs=[
            pl.BlockSpec((tb, D), lambda i: (i, 0)),         # batch-tiled x
            const(w1), const(w2), const(w3t), const(b12), const(b3),
        ],
        out_specs=pl.BlockSpec((2, tb), lambda i: (0, i)),   # lane-dense (2, B)
        compiler_params=pltpu.CompilerParams(
            dimension_semantics=(batch_sem,),
            # Working set at tb=4096 is < 8 MiB; 32 MiB is explicit (v5e default is
            # only 16 MiB) and leaves headroom under v7x's 64 MiB physical VMEM.
            vmem_limit_bytes=32 * 1024 * 1024,
        ),
    )(x, w1, w2, w3t, b12, b3)

    # Row 0 = q1, row 1 = q2 (torch: q_i(x).squeeze(-1)).
    return out[0], out[1]


def init_params(key, obs_dim, act_dim, hidden_sizes):
    """Deterministic synthetic init (uniform, torch.nn.Linear-style fan-in bound).

    Per-head layout: (w1 [D,H1], b1 [1,H1], w2 [H1,H2], b2 [1,H2], w3 [H2,1], b3 [1,1]).
    """
    sizes = [obs_dim + act_dim] + list(hidden_sizes) + [1]
    params = {}
    for name in ("q1", "q2"):
        layers = []
        for i in range(len(sizes) - 1):
            fan_in, fan_out = sizes[i], sizes[i + 1]
            key, kw, kb = jax.random.split(key, 3)
            bound = 1.0 / (fan_in ** 0.5)
            w = jax.random.uniform(kw, (fan_in, fan_out), jnp.float32, -bound, bound)
            b = jax.random.uniform(kb, (1, fan_out), jnp.float32, -bound, bound)
            layers.extend([w, b])
        params[name] = tuple(layers)
    return params


def pack_params(params, matmul_dtype=jnp.bfloat16):
    """Fuse the two per-head parameter sets into the kernel's layout.

    Weights are pre-cast to `matmul_dtype` ONCE here (not per grid step inside the
    kernel); biases stay f32 since they feed the f32 VPU epilogue.

    Returns:
      w1  [D, 2*H1]          heads side-by-side                (matmul_dtype)
      w2  [2*H1, 2*H2]       block-diagonal, off-diag zeros    (matmul_dtype)
      w3t [2, 2*H2]          transposed last layer (row0=q1)   (matmul_dtype)
      b12 [2, max(2H1,2H2)]  row 0 = b1 pack, row 1 = b2 pack  (f32)
      b3  [2, 1]             output biases                     (f32)
    """
    w1a_, b1a, w2a_, b2a, w3a_, b3a = params["q1"]
    w1b_, b1b, w2b_, b2b, w3b_, b3b = params["q2"]
    h1 = w1a_.shape[1]
    h2 = w2a_.shape[1]

    w1 = jnp.concatenate([w1a_, w1b_], axis=1)                  # [D, 2*h1]

    z2 = jnp.zeros((h1, h2), jnp.float32)
    w2 = jnp.block([[w2a_, z2], [z2, w2b_]])                    # [2*h1, 2*h2]

    z3 = jnp.zeros((h2, 1), jnp.float32)
    w3 = jnp.block([[w3a_, z3], [z3, w3b_]])                    # [2*h2, 2]
    w3t = w3.T                                                  # [2, 2*h2]

    width = max(2 * h1, 2 * h2)
    b12 = jnp.zeros((2, width), jnp.float32)
    b12 = b12.at[0, :2 * h1].set(jnp.concatenate([b1a, b1b], axis=1)[0])
    b12 = b12.at[1, :2 * h2].set(jnp.concatenate([b2a, b2b], axis=1)[0])
    b3 = jnp.concatenate([b3a, b3b], axis=1).reshape(2, 1)      # [2, 1]

    return (w1.astype(matmul_dtype), w2.astype(matmul_dtype),
            w3t.astype(matmul_dtype), b12, b3)


def _reference_forward(obs, act, params):
    """Plain-JAX reference of the torch module (per-head, un-fused, f32)."""
    x = jnp.concatenate([obs, act], axis=-1).astype(jnp.float32)

    def head(p):
        w1, b1, w2, b2, w3, b3 = p
        h = jnp.maximum(x @ w1 + b1, 0.0)
        h = jnp.maximum(h @ w2 + b2, 0.0)
        return (h @ w3 + b3)[:, 0]

    return head(params["q1"]), head(params["q2"])


if __name__ == "__main__":
    key = jax.random.PRNGKey(0)
    B, OBS_DIM, ACT_DIM = 8, 12, 4
    HIDDEN = (32, 32)

    k_obs, k_act, k_par = jax.random.split(key, 3)
    obs = jax.random.normal(k_obs, (B, OBS_DIM), jnp.float32)
    act = jax.random.normal(k_act, (B, ACT_DIM), jnp.float32)
    params = init_params(k_par, OBS_DIM, ACT_DIM, HIDDEN)

    r1, r2 = _reference_forward(obs, act, params)

    # Exact-semantics path: f32 MXU operands, matches the torch reference tightly.
    fused_f32 = pack_params(params, matmul_dtype=jnp.float32)
    q1, q2 = double_q_forward(obs, act, fused_f32)
    jax.block_until_ready((q1, q2))
    assert q1.shape == (B,) and q2.shape == (B,)
    assert jnp.allclose(q1, r1, atol=1e-5) and jnp.allclose(q2, r2, atol=1e-5)

    # Fast path for bf16-native v6e/v7x MXUs: bf16 operands, f32 accumulation.
    fused_bf16 = pack_params(params, matmul_dtype=jnp.bfloat16)
    p1, p2 = double_q_forward(obs, act, fused_bf16)
    jax.block_until_ready((p1, p2))
    assert jnp.allclose(p1, r1, atol=5e-2, rtol=5e-2)
    assert jnp.allclose(p2, r2, atol=5e-2, rtol=5e-2)

    print("KERNEL_OK")
</pallas_src>

<mosaic_0001>
module attributes {stable_mosaic.version = 11 : i64} {
  func.func @_fused_double_q_kernel(%arg0: i32, %arg1: memref<8x16xf32, #tpu.memory_space<vmem>>, %arg2: memref<16x64xf32, #tpu.memory_space<vmem>>, %arg3: memref<64x64xf32, #tpu.memory_space<vmem>>, %arg4: memref<2x64xf32, #tpu.memory_space<vmem>>, %arg5: memref<2x64xf32, #tpu.memory_space<vmem>>, %arg6: memref<2x1xf32, #tpu.memory_space<vmem>>, %arg7: memref<2x8xf32, #tpu.memory_space<vmem>>) attributes {dimension_semantics = [#tpu.dimension_semantics<parallel>], iteration_bounds = array<i64: 1>, scalar_prefetch = 0 : i64, scratch_operands = 0 : i64, tpu.core_type = #tpu.core_type<tc>, window_params = [{transform_indices = @transform_0, window_bounds = array<i64: 8, 16>}, {pipeline_mode = #tpu.pipeline_mode<synchronous>, transform_indices = @transform_1, window_bounds = array<i64: 16, 64>}, {pipeline_mode = #tpu.pipeline_mode<synchronous>, transform_indices = @transform_2, window_bounds = array<i64: 64, 64>}, {pipeline_mode = #tpu.pipeline_mode<synchronous>, transform_indices = @transform_3, window_bounds = array<i64: 2, 64>}, {pipeline_mode = #tpu.pipeline_mode<synchronous>, transform_indices = @transform_4, window_bounds = array<i64: 2, 64>}, {pipeline_mode = #tpu.pipeline_mode<synchronous>, transform_indices = @transform_5, window_bounds = array<i64: 2, 1>}, {transform_indices = @transform_6, window_bounds = array<i64: 2, 8>}]} {
    %c0 = arith.constant 0 : index
    %c0_0 = arith.constant 0 : index
    %0 = vector.load %arg1[%c0, %c0_0] : memref<8x16xf32, #tpu.memory_space<vmem>>, vector<8x16xf32>
    %c0_1 = arith.constant 0 : index
    %c0_2 = arith.constant 0 : index
    %1 = vector.load %arg5[%c0_1, %c0_2] : memref<2x64xf32, #tpu.memory_space<vmem>>, vector<1x64xf32>
    %c1 = arith.constant 1 : index
    %c0_3 = arith.constant 0 : index
    %2 = vector.load %arg5[%c1, %c0_3] : memref<2x64xf32, #tpu.memory_space<vmem>>, vector<1x64xf32>
    %c0_4 = arith.constant 0 : index
    %c0_5 = arith.constant 0 : index
    %3 = vector.load %arg2[%c0_4, %c0_5] : memref<16x64xf32, #tpu.memory_space<vmem>>, vector<16x64xf32>
    %cst = arith.constant dense<0.000000e+00> : vector<8x64xf32>
    %4 = tpu.matmul %0, %3, %cst {dimension_numbers = #tpu.dot_dimension_numbers<[1], [0], [0], [1], [0, 0, 1, 1], [], []>} : vector<8x16xf32>, vector<16x64xf32>, vector<8x64xf32> -> vector<8x64xf32>
    %5 = vector.broadcast %1 : vector<1x64xf32> to vector<8x64xf32>
    %6 = arith.addf %4, %5 : vector<8x64xf32>
    %cst_6 = arith.constant 0.000000e+00 : f32
    %7 = vector.broadcast %cst_6 : f32 to vector<8x64xf32>
    %8 = arith.maximumf %6, %7 : vector<8x64xf32>
    %c0_7 = arith.constant 0 : index
    %c0_8 = arith.constant 0 : index
    %9 = vector.load %arg3[%c0_7, %c0_8] : memref<64x64xf32, #tpu.memory_space<vmem>>, vector<64x64xf32>
    %cst_9 = arith.constant dense<0.000000e+00> : vector<8x64xf32>
    %10 = tpu.matmul %8, %9, %cst_9 {dimension_numbers = #tpu.dot_dimension_numbers<[1], [0], [0], [1], [0, 0, 1, 1], [], []>} : vector<8x64xf32>, vector<64x64xf32>, vector<8x64xf32> -> vector<8x64xf32>
    %11 = vector.broadcast %2 : vector<1x64xf32> to vector<8x64xf32>
    %12 = arith.addf %10, %11 : vector<8x64xf32>
    %cst_10 = arith.constant 0.000000e+00 : f32
    %13 = vector.broadcast %cst_10 : f32 to vector<8x64xf32>
    %14 = arith.maximumf %12, %13 : vector<8x64xf32>
    %c0_11 = arith.constant 0 : index
    %c0_12 = arith.constant 0 : index
    %15 = vector.load %arg4[%c0_11, %c0_12] : memref<2x64xf32, #tpu.memory_space<vmem>>, vector<2x64xf32>
    %cst_13 = arith.constant dense<0.000000e+00> : vector<2x8xf32>
    %16 = tpu.matmul %15, %14, %cst_13 {dimension_numbers = #tpu.dot_dimension_numbers<[1], [1], [0], [0], [0, 0, 1, 0], [], []>} : vector<2x64xf32>, vector<8x64xf32>, vector<2x8xf32> -> vector<2x8xf32>
    %c0_14 = arith.constant 0 : index
    %c0_15 = arith.constant 0 : index
    %17 = vector.load %arg6[%c0_14, %c0_15] : memref<2x1xf32, #tpu.memory_space<vmem>>, vector<2x1xf32>
    %18 = vector.broadcast %17 : vector<2x1xf32> to vector<2x8xf32>
    %19 = arith.addf %16, %18 : vector<2x8xf32>
    %c0_16 = arith.constant 0 : index
    %c0_17 = arith.constant 0 : index
    %20 = vector.load %arg7[%c0_16, %c0_17] : memref<2x8xf32, #tpu.memory_space<vmem>>, vector<2x8xf32>
    tpu.vector_store %arg7[%c0_16, %c0_17], %19 {strides = array<i32>} : memref<2x8xf32, #tpu.memory_space<vmem>>, vector<2x8xf32>,
    return
  }
  func.func @transform_0(%arg0: i32) -> (i32, i32) {
    %c0_i32 = arith.constant 0 : i32
    %c0_i32_0 = arith.constant 0 : i32
    return %arg0, %c0_i32 : i32, i32
  }
  func.func @transform_1(%arg0: i32) -> (i32, i32) {
    %c0_i32 = arith.constant 0 : i32
    %c0_i32_0 = arith.constant 0 : i32
    %c0_i32_1 = arith.constant 0 : i32
    return %c0_i32, %c0_i32_0 : i32, i32
  }
  func.func @transform_2(%arg0: i32) -> (i32, i32) {
    %c0_i32 = arith.constant 0 : i32
    %c0_i32_0 = arith.constant 0 : i32
    %c0_i32_1 = arith.constant 0 : i32
    return %c0_i32, %c0_i32_0 : i32, i32
  }
  func.func @transform_3(%arg0: i32) -> (i32, i32) {
    %c0_i32 = arith.constant 0 : i32
    %c0_i32_0 = arith.constant 0 : i32
    %c0_i32_1 = arith.constant 0 : i32
    return %c0_i32, %c0_i32_0 : i32, i32
  }
  func.func @transform_4(%arg0: i32) -> (i32, i32) {
    %c0_i32 = arith.constant 0 : i32
    %c0_i32_0 = arith.constant 0 : i32
    %c0_i32_1 = arith.constant 0 : i32
    return %c0_i32, %c0_i32_0 : i32, i32
  }
  func.func @transform_5(%arg0: i32) -> (i32, i32) {
    %c0_i32 = arith.constant 0 : i32
    %c0_i32_0 = arith.constant 0 : i32
    %c0_i32_1 = arith.constant 0 : i32
    return %c0_i32, %c0_i32_0 : i32, i32
  }
  func.func @transform_6(%arg0: i32) -> (i32, i32) {
    %c0_i32 = arith.constant 0 : i32
    %c0_i32_0 = arith.constant 0 : i32
    return %c0_i32, %arg0 : i32, i32
  }
}

</mosaic_0001>

<llo_original>
// kernel: tpu_custom_call.1
$region0: #{tpu_custom_call.1}
  #allocation0 [shape = 'u32[]', space=smem, size = 0x4, offset = 0x4, fixed_abs, tag = 'smem constant byte address 0x4 - core index']
  #allocation1 [shape = 'u32[144,128]{1,0:T(1,128)}', space=vmem, size = 0x12000, scoped, tag = 'internal scratch']
  %s0 = inlined_call_operand.hbm [shape: f32[8,16], index: 0, kind: input, shape index: {}]
  %s1 = inlined_call_operand.hbm [shape: f32[16,64], index: 1, kind: input, shape index: {}]
  %s2 = inlined_call_operand.hbm [shape: f32[64,64], index: 2, kind: input, shape index: {}]
  %s3 = inlined_call_operand.vmem [shape: f32[2,64], index: 3, kind: input, shape index: {}]
  %s4 = inlined_call_operand.vmem [shape: f32[2,64], index: 4, kind: input, shape index: {}]
  %s5 = inlined_call_operand.vmem [shape: f32[2,1], index: 5, kind: input, shape index: {}]
  %s6 = inlined_call_operand.hbm [shape: f32[2,8], index: 6, kind: output, shape index: {}]
  %s7 = sld [smem:[#allocation0]]
  $region46: #{tpu_custom_call.1} parent=0
    _
  %s9 = ssub.s32 1, %s7
  %s10 = scalar_select 0, %s9, %s7
  $region1: #{tpu_custom_call.1} parent=0
    #allocation2 [shape = 'u8[4096]{0}', space=vmem, size = 0x1000, scoped, tag = 'input window, operand 0, single buffered']
    #allocation3 [shape = 's32[1]{0}', space=sflag, size = 0x4, scoped, tag = 'scoped memory for tpu_custom_call.1']
    #allocation4 [shape = 's32[1]{0}', space=sflag, size = 0x4, scoped, tag = 'scoped memory for tpu_custom_call.1']
    #allocation5 [shape = 'u8[8192]{0}', space=vmem, size = 0x2000, scoped, tag = 'input window, operand 1, single buffered']
    #allocation6 [shape = 's32[1]{0}', space=sflag, size = 0x4, scoped, tag = 'scoped memory for tpu_custom_call.1']
    #allocation7 [shape = 'u8[32768]{0}', space=vmem, size = 0x8000, scoped, tag = 'input window, operand 2, single buffered']
    #allocation8 [shape = 'u8[1024]{0}', space=vmem, size = 0x400, scoped, tag = 'output window, operand 0, single buffered']
    %11 = vsyncpa [#allocation3], 0
    %12 = vsyncpa [#allocation6], 0
    %13 = vsyncpa [#allocation4], 0
    // Predicated region
    $region2: #{tpu_custom_call.1} parent=1 // pred_check
      _
    $region3: #{tpu_custom_call.1} parent=1 // pred_check_branch
      %15 = sbr.rel (0) target = $region5
    $region4: #{tpu_custom_call.1} parent=1 // pred_region
      %s17 = ssub.s32 128, 128
      %18 = vsyncadd [#allocation3], %s17
      %s20 = sshll.u32 [#allocation2], 4
      %s21 = int_to_ptr.vmem [resolvable:$true] %s20
      %23 = dma.hbm_to_vmem [thread:$0]  %s0, 128, %s21, [#allocation3]
    $region5: #{tpu_custom_call.1} parent=1 // pred_fallthru
      _
    // Predicated region
    $region6: #{tpu_custom_call.1} parent=1 // pred_check
      _
    $region7: #{tpu_custom_call.1} parent=1 // pred_check_branch
      %25 = sbr.rel (0) target = $region9
    $region8: #{tpu_custom_call.1} parent=1 // pred_region
      %s27 = ssub.s32 256, 256
      %28 = vsyncadd [#allocation6], %s27
      %s29 = sshll.u32 [#allocation5], 4
      %s30 = int_to_ptr.vmem [resolvable:$true] %s29
      %35 = dma.hbm_to_vmem [thread:$0]  %s1, 256, %s30, [#allocation6], 128, 128, 8
    $region9: #{tpu_custom_call.1} parent=1 // pred_fallthru
      _
    // Predicated region
    $region10: #{tpu_custom_call.1} parent=1 // pred_check
      _
    $region11: #{tpu_custom_call.1} parent=1 // pred_check_branch
      %37 = sbr.rel (0) target = $region13
    $region12: #{tpu_custom_call.1} parent=1 // pred_region
      %s39 = ssub.s32 1024, 1024
      %40 = vsyncadd [#allocation6], %s39
      %s41 = sshll.u32 [#allocation7], 4
      %s42 = int_to_ptr.vmem [resolvable:$true] %s41
      %47 = dma.hbm_to_vmem [thread:$0]  %s2, 1024, %s42, [#allocation6], 128, 128, 8
    $region13: #{tpu_custom_call.1} parent=1 // pred_fallthru
      _
    // Predicated region
    $region14: #{tpu_custom_call.1} parent=1 // pred_check
      _
    $region15: #{tpu_custom_call.1} parent=1 // pred_check_branch
      %49 = sbr.rel (0) target = $region17
    $region16: #{tpu_custom_call.1} parent=1 // pred_region
      _
    $region17: #{tpu_custom_call.1} parent=1 // pred_fallthru
      _
    // Predicated region
    $region18: #{tpu_custom_call.1} parent=1 // pred_check
      _
    $region19: #{tpu_custom_call.1} parent=1 // pred_check_branch
      %51 = sbr.rel (0) target = $region21
    $region20: #{tpu_custom_call.1} parent=1 // pred_region
      _
    $region21: #{tpu_custom_call.1} parent=1 // pred_fallthru
      _
    // Predicated region
    $region22: #{tpu_custom_call.1} parent=1 // pred_check
      _
    $region23: #{tpu_custom_call.1} parent=1 // pred_check_branch
      %53 = sbr.rel (0) target = $region25
    $region24: #{tpu_custom_call.1} parent=1 // pred_region
      _
    $region25: #{tpu_custom_call.1} parent=1 // pred_fallthru
      _
    // Predicated region
    $region26: #{tpu_custom_call.1} parent=1 // pred_check
      _
    $region27: #{tpu_custom_call.1} parent=1 // pred_check_branch
      %55 = sbr.rel (0) target = $region29
    $region28: #{tpu_custom_call.1} parent=1 // pred_region
      %56 = dma.done [#allocation3], 128
    $region29: #{tpu_custom_call.1} parent=1 // pred_fallthru
      _
    // Predicated region
    $region30: #{tpu_custom_call.1} parent=1 // pred_check
      _
    $region31: #{tpu_custom_call.1} parent=1 // pred_check_branch
      %58 = sbr.rel (0) target = $region33
    $region32: #{tpu_custom_call.1} parent=1 // pred_region
      %59 = dma.done [#allocation6], 256
    $region33: #{tpu_custom_call.1} parent=1 // pred_fallthru
      _
    // Predicated region
    $region34: #{tpu_custom_call.1} parent=1 // pred_check
      _
    $region35: #{tpu_custom_call.1} parent=1 // pred_check_branch
      %61 = sbr.rel (0) target = $region37
    $region36: #{tpu_custom_call.1} parent=1 // pred_region
      %62 = dma.done [#allocation6], 1024
    $region37: #{tpu_custom_call.1} parent=1 // pred_fallthru
      _
    %v63 = vld [vmem:[#allocation2] sm:$0xff]
    %v64 = vld [vmem:[%s4] sm:$0x1]
    %v65 = vld [vmem:[%s4 + $0x1] sm:$0x1]
    %v66 = vld [vmem:[#allocation5] sm:$0xff]
    %v67 = vld [vmem:[#allocation5 + $0x8] sm:$0xff]
    %v68 = vlaneseq
    %v69 = vshrl.u32 %v68, 7
    %v70 = vsub.s32 0, %v69
    %v71 = vrot.slane %v64, %v70
    %vm72 = vcmask 130048
    %v74 = vsel %vm72, %v63, 0
    %76 = vmatprep.subr.mxu0 0.0
    %77 = vmatpush1.msra.mxu0 %v66
    %78 = vmatprep.subr.mxu0 0.0
    %79 = vmatpush1.msra.mxu0 %v67
    %80 = vmatprep.subr.mxu0 0.0
    %81 = vmatpush1.msra.mxu0 0.0
    %82 = vmatprep.subr.mxu0 0.0
    %83 = vmatpush1.msra.mxu0 0.0
    %84 = vmatprep.subr.mxu0 0.0
    %85 = vmatpush1.msra.mxu0 0.0
    %86 = vmatprep.subr.mxu0 0.0
    %87 = vmatpush1.msra.mxu0 0.0
    %88 = vmatprep.subr.mxu0 0.0
    %89 = vmatpush1.msra.mxu0 0.0
    %90 = vmatprep.subr.mxu0 0.0
    %91 = vmatpush1.msra.mxu0 0.0
    %92 = vmatprep.subr.mxu0 0.0
    %93 = vmatpush1.msra.mxu0 0.0
    %94 = vmatprep.subr.mxu0 0.0
    %95 = vmatpush1.msra.mxu0 0.0
    %96 = vmatprep.subr.mxu0 0.0
    %97 = vmatpush1.msra.mxu0 0.0
    %98 = vmatprep.subr.mxu0 0.0
    %99 = vmatpush1.msra.mxu0 0.0
    %100 = vmatprep.subr.mxu0 0.0
    %101 = vmatpush1.msra.mxu0 0.0
    %102 = vmatprep.subr.mxu0 0.0
    %103 = vmatpush1.msra.mxu0 0.0
    %104 = vmatprep.subr.mxu0 0.0
    %105 = vmatpush1.msra.mxu0 0.0
    %106 = vmatprep.subr.mxu0 0.0
    %107 = vmatpush1.msra.mxu0 0.0
    %108 = vmatprep.subr.mxu0 0.0
    %109 = vmatpush1.msra.mxu0 0.0
    %110 = vmatprep.subr.mxu0 0.0
    %111 = vmatpush1.msra.mxu0 0.0
    %112 = vmatprep.subr.mxu0 0.0
    %113 = vmatpush1.msra.mxu0 0.0
    %114 = vmatprep.subr.mxu0 0.0
    %115 = vmatpush1.msra.mxu0 0.0
    %116 = vmatprep.subr.mxu0 0.0
    %117 = vmatpush1.msra.mxu0 0.0
    %118 = vmatprep.subr.mxu0 0.0
    %119 = vmatpush1.msra.mxu0 0.0
    %120 = vmatprep.subr.mxu0 0.0
    %121 = vmatpush1.msra.mxu0 0.0
    %122 = vmatprep.subr.mxu0 0.0
    %123 = vmatpush1.msra.mxu0 0.0
    %124 = vmatprep.subr.mxu0 0.0
    %125 = vmatpush1.msra.mxu0 0.0
    %126 = vmatprep.subr.mxu0 0.0
    %127 = vmatpush1.msra.mxu0 0.0
    %128 = vmatprep.subr.mxu0 0.0
    %129 = vmatpush1.msra.mxu0 0.0
    %130 = vmatprep.subr.mxu0 0.0
    %131 = vmatpush1.msra.mxu0 0.0
    %132 = vmatprep.subr.mxu0 0.0
    %133 = vmatpush1.msra.mxu0 0.0
    %134 = vmatprep.subr.mxu0 0.0
    %135 = vmatpush1.msra.mxu0 0.0
    %136 = vmatprep.subr.mxu0 0.0
    %137 = vmatpush1.msra.mxu0 0.0
    %138 = vmatprep.subr.mxu0 0.0
    %139 = vmatpush1.msra.mxu0 0.0
    %140 = vmatprep.mubr.f32.mxu0 0.0
    %141 = vmatmul.mubr.f32.gmra.mrb[0].mxu0 %v74
    %v142 = vpop.f32.mrb[0].mxu0
    %v143 = vadd.f32 %v71, %v142
    %v144 = vpop.f32.mrb[0].mxu0
    %145 = vdwg.mxu0
    %v146 = vmax.f32 %v143, 0.0
    %v147 = vld [vmem:[#allocation7] sm:$0xff]
    %v148 = vld [vmem:[#allocation7 + $0x8] sm:$0xff]
    %v149 = vld [vmem:[#allocation7 + $0x10] sm:$0xff]
    %v150 = vld [vmem:[#allocation7 + $0x18] sm:$0xff]
    %v151 = vld [vmem:[#allocation7 + $0x20] sm:$0xff]
    %v152 = vld [vmem:[#allocation7 + $0x28] sm:$0xff]
    %v153 = vld [vmem:[#allocation7 + $0x30] sm:$0xff]
    %v154 = vld [vmem:[#allocation7 + $0x38] sm:$0xff]
    %v155 = vlaneseq
    %v156 = vshrl.u32 %v155, 7
    %v157 = vsub.s32 0, %v156
    %v158 = vrot.slane %v65, %v157
    %vm159 = vcmask 523264
    %v161 = vsel %vm159, %v146, 0
    %163 = vmatprep.subr.mxu0 0.0
    %164 = vmatpush1.msra.mxu0 %v147
    %165 = vmatprep.subr.mxu0 0.0
    %166 = vmatpush1.msra.mxu0 %v148
    %167 = vmatprep.subr.mxu0 0.0
    %168 = vmatpush1.msra.mxu0 %v149
    %169 = vmatprep.subr.mxu0 0.0
    %170 = vmatpush1.msra.mxu0 %v150
    %171 = vmatprep.subr.mxu0 0.0
    %172 = vmatpush1.msra.mxu0 %v151
    %173 = vmatprep.subr.mxu0 0.0
    %174 = vmatpush1.msra.mxu0 %v152
    %175 = vmatprep.subr.mxu0 0.0
    %176 = vmatpush1.msra.mxu0 %v153
    %177 = vmatprep.subr.mxu0 0.0
    %178 = vmatpush1.msra.mxu0 %v154
    %179 = vmatprep.subr.mxu0 0.0
    %180 = vmatpush1.msra.mxu0 0.0
    %181 = vmatprep.subr.mxu0 0.0
    %182 = vmatpush1.msra.mxu0 0.0
    %183 = vmatprep.subr.mxu0 0.0
    %184 = vmatpush1.msra.mxu0 0.0
    %185 = vmatprep.subr.mxu0 0.0
    %186 = vmatpush1.msra.mxu0 0.0
    %187 = vmatprep.subr.mxu0 0.0
    %188 = vmatpush1.msra.mxu0 0.0
    %189 = vmatprep.subr.mxu0 0.0
    %190 = vmatpush1.msra.mxu0 0.0
    %191 = vmatprep.subr.mxu0 0.0
    %192 = vmatpush1.msra.mxu0 0.0
    %193 = vmatprep.subr.mxu0 0.0
    %194 = vmatpush1.msra.mxu0 0.0
    %195 = vmatprep.subr.mxu0 0.0
    %196 = vmatpush1.msra.mxu0 0.0
    %197 = vmatprep.subr.mxu0 0.0
    %198 = vmatpush1.msra.mxu0 0.0
    %199 = vmatprep.subr.mxu0 0.0
    %200 = vmatpush1.msra.mxu0 0.0
    %201 = vmatprep.subr.mxu0 0.0
    %202 = vmatpush1.msra.mxu0 0.0
    %203 = vmatprep.subr.mxu0 0.0
    %204 = vmatpush1.msra.mxu0 0.0
    %205 = vmatprep.subr.mxu0 0.0
    %206 = vmatpush1.msra.mxu0 0.0
    %207 = vmatprep.subr.mxu0 0.0
    %208 = vmatpush1.msra.mxu0 0.0
    %209 = vmatprep.subr.mxu0 0.0
    %210 = vmatpush1.msra.mxu0 0.0
    %211 = vmatprep.subr.mxu0 0.0
    %212 = vmatpush1.msra.mxu0 0.0
    %213 = vmatprep.subr.mxu0 0.0
    %214 = vmatpush1.msra.mxu0 0.0
    %215 = vmatprep.subr.mxu0 0.0
    %216 = vmatpush1.msra.mxu0 0.0
    %217 = vmatprep.subr.mxu0 0.0
    %218 = vmatpush1.msra.mxu0 0.0
    %219 = vmatprep.subr.mxu0 0.0
    %220 = vmatpush1.msra.mxu0 0.0
    %221 = vmatprep.subr.mxu0 0.0
    %222 = vmatpush1.msra.mxu0 0.0
    %223 = vmatprep.subr.mxu0 0.0
    %224 = vmatpush1.msra.mxu0 0.0
    %225 = vmatprep.subr.mxu0 0.0
    %226 = vmatpush1.msra.mxu0 0.0
    %227 = vmatprep.mubr.f32.mxu0 0.0
    %228 = vmatmul.mubr.f32.gmra.mrb[0].mxu0 %v161
    %v229 = vpop.f32.mrb[0].mxu0
    %v230 = vadd.f32 %v158, %v229
    %v231 = vpop.f32.mrb[0].mxu0
    %232 = vdwg.mxu0
    %v233 = vmax.f32 %v230, 0.0
    %v234 = vld [vmem:[%s3] sm:$0x3]
    %v235 = vld [vmem:[%s5] sm:$0x3]
    %237 = vset.pattern.permute.xlu0 0
    %238 = vperm.xlu0 %237, %v235
    %v239 = vpop.permute.xlu0 %238
    %v242 = vsel %vm159, %v234, 0
    %v245 = vsel %vm159, %v233, 0
    %247 = vmatprep.subr.mxu0 0.0
    %248 = vmatpush1.xpose.msra.mxu0 %v245
    %249 = vmatprep.subr.mxu0 0.0
    %250 = vmatpush1.xpose.msra.mxu0 0.0
    %251 = vmatprep.subr.mxu0 0.0
    %252 = vmatpush1.xpose.msra.mxu0 0.0
    %253 = vmatprep.subr.mxu0 0.0
    %254 = vmatpush1.xpose.msra.mxu0 0.0
    %255 = vmatprep.subr.mxu0 0.0
    %256 = vmatpush1.xpose.msra.mxu0 0.0
    %257 = vmatprep.subr.mxu0 0.0
    %258 = vmatpush1.xpose.msra.mxu0 0.0
    %259 = vmatprep.subr.mxu0 0.0
    %260 = vmatpush1.xpose.msra.mxu0 0.0
    %261 = vmatprep.subr.mxu0 0.0
    %262 = vmatpush1.xpose.msra.mxu0 0.0
    %263 = vmatprep.subr.mxu0 0.0
    %264 = vmatpush1.xpose.msra.mxu0 0.0
    %265 = vmatprep.subr.mxu0 0.0
    %266 = vmatpush1.xpose.msra.mxu0 0.0
    %267 = vmatprep.subr.mxu0 0.0
    %268 = vmatpush1.xpose.msra.mxu0 0.0
    %269 = vmatprep.subr.mxu0 0.0
    %270 = vmatpush1.xpose.msra.mxu0 0.0
    %271 = vmatprep.subr.mxu0 0.0
    %272 = vmatpush1.xpose.msra.mxu0 0.0
    %273 = vmatprep.subr.mxu0 0.0
    %274 = vmatpush1.xpose.msra.mxu0 0.0
    %275 = vmatprep.subr.mxu0 0.0
    %276 = vmatpush1.xpose.msra.mxu0 0.0
    %277 = vmatprep.subr.mxu0 0.0
    %278 = vmatpush1.xpose.msra.mxu0 0.0
    %279 = vmatprep.subr.mxu0 0.0
    %280 = vmatpush1.xpose.msra.mxu0 0.0
    %281 = vmatprep.subr.mxu0 0.0
    %282 = vmatpush1.xpose.msra.mxu0 0.0
    %283 = vmatprep.subr.mxu0 0.0
    %284 = vmatpush1.xpose.msra.mxu0 0.0
    %285 = vmatprep.subr.mxu0 0.0
    %286 = vmatpush1.xpose.msra.mxu0 0.0
    %287 = vmatprep.subr.mxu0 0.0
    %288 = vmatpush1.xpose.msra.mxu0 0.0
    %289 = vmatprep.subr.mxu0 0.0
    %290 = vmatpush1.xpose.msra.mxu0 0.0
    %291 = vmatprep.subr.mxu0 0.0
    %292 = vmatpush1.xpose.msra.mxu0 0.0
    %293 = vmatprep.subr.mxu0 0.0
    %294 = vmatpush1.xpose.msra.mxu0 0.0
    %295 = vmatprep.subr.mxu0 0.0
    %296 = vmatpush1.xpose.msra.mxu0 0.0
    %297 = vmatprep.subr.mxu0 0.0
    %298 = vmatpush1.xpose.msra.mxu0 0.0
    %299 = vmatprep.subr.mxu0 0.0
    %300 = vmatpush1.xpose.msra.mxu0 0.0
    %301 = vmatprep.subr.mxu0 0.0
    %302 = vmatpush1.xpose.msra.mxu0 0.0
    %303 = vmatprep.subr.mxu0 0.0
    %304 = vmatpush1.xpose.msra.mxu0 0.0
    %305 = vmatprep.subr.mxu0 0.0
    %306 = vmatpush1.xpose.msra.mxu0 0.0
    %307 = vmatprep.subr.mxu0 0.0
    %308 = vmatpush1.xpose.msra.mxu0 0.0
    %309 = vmatprep.subr.mxu0 0.0
    %310 = vmatpush1.xpose.msra.mxu0 0.0
    %311 = vmatprep.mubr.f32.mxu0 0.0
    %312 = vmatmul.mubr.f32.gmra.mrb[0].mxu0 %v242
    %v313 = vpop.f32.mrb[0].mxu0
    %v314 = vadd.f32 %v239, %v313
    %v315 = vpop.f32.mrb[0].mxu0
    %316 = vdwg.mxu0
    %vm317 = vcmask 58368
    %318 = vst.msk [vmem:[#allocation8] sm:$0x3] %vm317, %v314
    // Predicated region
    $region38: #{tpu_custom_call.1} parent=1 // pred_check
      _
    $region39: #{tpu_custom_call.1} parent=1 // pred_check_branch
      %320 = sbr.rel (0) target = $region41
    $region40: #{tpu_custom_call.1} parent=1 // pred_region
      %s322 = ssub.s32 32, 32
      %323 = vsyncadd [#allocation4], %s322
      %s325 = sshll.u32 [#allocation8], 4
      %s326 = int_to_ptr.vmem [resolvable:$true] %s325
      %328 = dma.vmem_to_hbm [thread:$0]  %s326, 32, %s6, [#allocation4]
    $region41: #{tpu_custom_call.1} parent=1 // pred_fallthru
      _
    // Predicated region
    $region42: #{tpu_custom_call.1} parent=1 // pred_check
      _
    $region43: #{tpu_custom_call.1} parent=1 // pred_check_branch
      %330 = sbr.rel (0) target = $region45
    $region44: #{tpu_custom_call.1} parent=1 // pred_region
      %331 = dma.done [#allocation4], 32
    $region45: #{tpu_custom_call.1} parent=1 // pred_fallthru
      _
    %332 = vsyncpa [#allocation3], 1
    %333 = vsyncpa [#allocation6], 1
    %334 = vsyncpa [#allocation4], 1

</llo_original>
